<compile_context>
chip_gen: v5e
topology: v5e:2x2
jax: 0.10.0
libtpu: 0.0.40
codegen_flags: <defaults>
</compile_context>

<pallas_src>
import jax
import jax.numpy as jnp
from jax.experimental import pallas as pl
from jax.experimental.pallas import tpu as pltpu


def _decoder_rnn_kernel(x_ref, wih_ref, whh_ref, b_ref,
                        w1_ref, b1_ref, w2_ref, b2_ref, out_ref):
    B, T, D = x_ref.shape
    H = whh_ref.shape[0]

    # ---- Hoist the input projection out of the recurrence -------------------
    # One (B*T, D) @ (D, 4H) matmul + bias; reshapes keep the lane (last) dim
    # fixed and are tile-aligned, so they are layout no-ops.
    x_all = x_ref[...].reshape(B * T, D)
    xw = jnp.dot(x_all, wih_ref[...], preferred_element_type=jnp.float32) + b_ref[...]
    xw = xw.reshape(B, T, 4 * H)                      # batch-first, (B, T, 4H)

    w_hh = whh_ref[...]                               # (H, 4H), resident in vregs/VMEM

    # ---- Sequential LSTM recurrence, fully unrolled (static T) --------------
    h = jnp.zeros((B, H), jnp.float32)
    c = jnp.zeros((B, H), jnp.float32)
    for t in range(T):                                # static indices -> static slices
        gates = xw[:, t, :] + jnp.dot(h, w_hh, preferred_element_type=jnp.float32)
        # Full-register transcendentals on the (B, 4H) vreg (EUP slot), then
        # static lane slices to extract the four gate chunks.
        sig = jax.nn.sigmoid(gates)
        tnh = jnp.tanh(gates)
        i_g = sig[:, 0 * H:1 * H]
        f_g = sig[:, 1 * H:2 * H]
        g_g = tnh[:, 2 * H:3 * H]
        o_g = sig[:, 3 * H:4 * H]
        c = f_g * c + i_g * g_g
        h = o_g * jnp.tanh(c)

    # ---- FC head on RNN_out[:, -1, :] (== final h) ---------------------------
    z = jnp.dot(h, w1_ref[...], preferred_element_type=jnp.float32) + b1_ref[...]
    z = jnp.maximum(z, 0.0)
    # TODO(synk): F.dropout with training=True not implemented; eval-mode identity used.
    y = jnp.dot(z, w2_ref[...], preferred_element_type=jnp.float32) + b2_ref[...]
    out_ref[...] = jax.nn.sigmoid(y).astype(out_ref.dtype)


def decoder_rnn_forward(x, params):
    """x: (B, T, D) float32, batch-first like the PyTorch module."""
    B, T, D = x.shape
    C = params["w2_t"].shape[1]

    vmem_spec = lambda: pl.BlockSpec(memory_space=pltpu.MemorySpace.VMEM)

    return pl.pallas_call(
        _decoder_rnn_kernel,
        out_shape=jax.ShapeDtypeStruct((B, C), jnp.float32),
        in_specs=[vmem_spec() for _ in range(8)],      # whole arrays resident in VMEM
        out_specs=vmem_spec(),
    )(x, params["wih_t"], params["whh_t"], params["b"],
      params["w1_t"], params["b1"], params["w2_t"], params["b2"])


def init_params(key, D, H, FC, C):
    """Deterministic synthetic parameters (shapes match nn.LSTM / nn.Linear)."""
    ks = jax.random.split(key, 8)
    s = 0.1
    w_ih = jax.random.uniform(ks[0], (4 * H, D), jnp.float32, -s, s)   # LSTM weight_ih_l0
    w_hh = jax.random.uniform(ks[1], (4 * H, H), jnp.float32, -s, s)   # LSTM weight_hh_l0
    b_ih = jax.random.uniform(ks[2], (4 * H,), jnp.float32, -s, s)
    b_hh = jax.random.uniform(ks[3], (4 * H,), jnp.float32, -s, s)
    w1 = jax.random.uniform(ks[4], (FC, H), jnp.float32, -s, s)        # fc1.weight
    b1 = jax.random.uniform(ks[5], (FC,), jnp.float32, -s, s)
    w2 = jax.random.uniform(ks[6], (C, FC), jnp.float32, -s, s)        # fc2.weight
    b2 = jax.random.uniform(ks[7], (C,), jnp.float32, -s, s)
    return {
        "wih_t": w_ih.T,                        # (D, 4H)
        "whh_t": w_hh.T,                        # (H, 4H)
        "b": (b_ih + b_hh).reshape(1, 4 * H),   # (1, 4H)
        "w1_t": w1.T,                           # (H, FC)
        "b1": b1.reshape(1, FC),
        "w2_t": w2.T,                           # (FC, C)
        "b2": b2.reshape(1, C),
    }


def decoder_rnn_reference(x, params):
    """Pure-JAX reference of the PyTorch forward (eval mode)."""
    B, T, D = x.shape
    H = params["whh_t"].shape[0]

    def step(carry, x_t):
        h, c = carry
        gates = x_t @ params["wih_t"] + h @ params["whh_t"] + params["b"]
        i = jax.nn.sigmoid(gates[:, 0 * H:1 * H])
        f = jax.nn.sigmoid(gates[:, 1 * H:2 * H])
        g = jnp.tanh(gates[:, 2 * H:3 * H])
        o = jax.nn.sigmoid(gates[:, 3 * H:4 * H])
        c = f * c + i * g
        h = o * jnp.tanh(c)
        return (h, c), h

    h0 = jnp.zeros((B, H), jnp.float32)
    (h_last, _), _ = jax.lax.scan(step, (h0, h0), jnp.transpose(x, (1, 0, 2)))
    z = jnp.maximum(h_last @ params["w1_t"] + params["b1"], 0.0)
    return jax.nn.sigmoid(z @ params["w2_t"] + params["b2"])


if __name__ == "__main__":
    # Small shapes consistent with the module: batch=2, seq=8, embed=32,
    # hidden=32, fc=16, classes=1.
    B, T, D, H, FC, C = 2, 8, 32, 32, 16, 1

    key = jax.random.PRNGKey(0)
    k_x, k_p = jax.random.split(key)
    x = jax.random.normal(k_x, (B, T, D), jnp.float32)
    params = init_params(k_p, D, H, FC, C)

    out = decoder_rnn_forward(x, params)
    out = jax.block_until_ready(out)

    ref = decoder_rnn_reference(x, params)
    assert out.shape == (B, C)
    assert jnp.allclose(out, ref, atol=1e-5, rtol=1e-5), (out, ref)

    print("KERNEL_OK")
</pallas_src>

<mosaic_0001>
module attributes {stable_mosaic.version = 11 : i64} {
  func.func @_decoder_rnn_kernel(%arg0: memref<2x8x32xf32, #tpu.memory_space<vmem>>, %arg1: memref<32x128xf32, #tpu.memory_space<vmem>>, %arg2: memref<32x128xf32, #tpu.memory_space<vmem>>, %arg3: memref<1x128xf32, #tpu.memory_space<vmem>>, %arg4: memref<32x16xf32, #tpu.memory_space<vmem>>, %arg5: memref<1x16xf32, #tpu.memory_space<vmem>>, %arg6: memref<16x1xf32, #tpu.memory_space<vmem>>, %arg7: memref<1x1xf32, #tpu.memory_space<vmem>>, %arg8: memref<2x1xf32, #tpu.memory_space<vmem>>) attributes {dimension_semantics = [], scalar_prefetch = 0 : i64, scratch_operands = 0 : i64, tpu.core_type = #tpu.core_type<tc>} {
    %c0 = arith.constant 0 : index
    %c0_0 = arith.constant 0 : index
    %c0_1 = arith.constant 0 : index
    %0 = vector.load %arg0[%c0, %c0_0, %c0_1] : memref<2x8x32xf32, #tpu.memory_space<vmem>>, vector<2x8x32xf32>
    %1 = vector.shape_cast %0 : vector<2x8x32xf32> to vector<16x32xf32>
    %c0_2 = arith.constant 0 : index
    %c0_3 = arith.constant 0 : index
    %2 = vector.load %arg1[%c0_2, %c0_3] : memref<32x128xf32, #tpu.memory_space<vmem>>, vector<32x128xf32>
    %cst = arith.constant dense<0.000000e+00> : vector<16x128xf32>
    %3 = tpu.matmul %1, %2, %cst {dimension_numbers = #tpu.dot_dimension_numbers<[1], [0], [0], [1], [0, 0, 1, 1], [], []>} : vector<16x32xf32>, vector<32x128xf32>, vector<16x128xf32> -> vector<16x128xf32>
    %c0_4 = arith.constant 0 : index
    %c0_5 = arith.constant 0 : index
    %4 = vector.load %arg3[%c0_4, %c0_5] : memref<1x128xf32, #tpu.memory_space<vmem>>, vector<1x128xf32>
    %5 = vector.broadcast %4 : vector<1x128xf32> to vector<16x128xf32>
    %6 = arith.addf %3, %5 : vector<16x128xf32>
    %7 = vector.shape_cast %6 : vector<16x128xf32> to vector<2x8x128xf32>
    %c0_6 = arith.constant 0 : index
    %c0_7 = arith.constant 0 : index
    %8 = vector.load %arg2[%c0_6, %c0_7] : memref<32x128xf32, #tpu.memory_space<vmem>>, vector<32x128xf32>
    %cst_8 = arith.constant 0.000000e+00 : f32
    %9 = vector.broadcast %cst_8 : f32 to vector<2x32xf32>
    %cst_9 = arith.constant 0.000000e+00 : f32
    %10 = vector.broadcast %cst_9 : f32 to vector<2x32xf32>
    %11 = vector.extract_strided_slice %7 {offsets = [0, 0, 0], sizes = [2, 1, 128], strides = [1, 1, 1]} : vector<2x8x128xf32> to vector<2x1x128xf32>
    %12 = vector.shape_cast %11 : vector<2x1x128xf32> to vector<2x128xf32>
    %cst_10 = arith.constant dense<0.000000e+00> : vector<2x128xf32>
    %13 = tpu.matmul %9, %8, %cst_10 {dimension_numbers = #tpu.dot_dimension_numbers<[1], [0], [0], [1], [0, 0, 1, 1], [], []>} : vector<2x32xf32>, vector<32x128xf32>, vector<2x128xf32> -> vector<2x128xf32>
    %14 = arith.addf %12, %13 : vector<2x128xf32>
    %15 = arith.negf %14 : vector<2x128xf32>
    %16 = math.exp %15 : vector<2x128xf32>
    %cst_11 = arith.constant 1.000000e+00 : f32
    %17 = vector.broadcast %cst_11 : f32 to vector<2x128xf32>
    %18 = arith.addf %17, %16 : vector<2x128xf32>
    %19 = arith.divf %17, %18 : vector<2x128xf32>
    %20 = math.tanh %14 : vector<2x128xf32>
    %21 = vector.extract_strided_slice %19 {offsets = [0, 0], sizes = [2, 32], strides = [1, 1]} : vector<2x128xf32> to vector<2x32xf32>
    %22 = vector.extract_strided_slice %19 {offsets = [0, 32], sizes = [2, 32], strides = [1, 1]} : vector<2x128xf32> to vector<2x32xf32>
    %23 = vector.extract_strided_slice %20 {offsets = [0, 64], sizes = [2, 32], strides = [1, 1]} : vector<2x128xf32> to vector<2x32xf32>
    %24 = vector.extract_strided_slice %19 {offsets = [0, 96], sizes = [2, 32], strides = [1, 1]} : vector<2x128xf32> to vector<2x32xf32>
    %25 = arith.mulf %22, %10 : vector<2x32xf32>
    %26 = arith.mulf %21, %23 : vector<2x32xf32>
    %27 = arith.addf %25, %26 : vector<2x32xf32>
    %28 = math.tanh %27 : vector<2x32xf32>
    %29 = arith.mulf %24, %28 : vector<2x32xf32>
    %30 = vector.extract_strided_slice %7 {offsets = [0, 1, 0], sizes = [2, 1, 128], strides = [1, 1, 1]} : vector<2x8x128xf32> to vector<2x1x128xf32>
    %31 = vector.shape_cast %30 : vector<2x1x128xf32> to vector<2x128xf32>
    %cst_12 = arith.constant dense<0.000000e+00> : vector<2x128xf32>
    %32 = tpu.matmul %29, %8, %cst_12 {dimension_numbers = #tpu.dot_dimension_numbers<[1], [0], [0], [1], [0, 0, 1, 1], [], []>} : vector<2x32xf32>, vector<32x128xf32>, vector<2x128xf32> -> vector<2x128xf32>
    %33 = arith.addf %31, %32 : vector<2x128xf32>
    %34 = arith.negf %33 : vector<2x128xf32>
    %35 = math.exp %34 : vector<2x128xf32>
    %cst_13 = arith.constant 1.000000e+00 : f32
    %36 = vector.broadcast %cst_13 : f32 to vector<2x128xf32>
    %37 = arith.addf %36, %35 : vector<2x128xf32>
    %38 = arith.divf %36, %37 : vector<2x128xf32>
    %39 = math.tanh %33 : vector<2x128xf32>
    %40 = vector.extract_strided_slice %38 {offsets = [0, 0], sizes = [2, 32], strides = [1, 1]} : vector<2x128xf32> to vector<2x32xf32>
    %41 = vector.extract_strided_slice %38 {offsets = [0, 32], sizes = [2, 32], strides = [1, 1]} : vector<2x128xf32> to vector<2x32xf32>
    %42 = vector.extract_strided_slice %39 {offsets = [0, 64], sizes = [2, 32], strides = [1, 1]} : vector<2x128xf32> to vector<2x32xf32>
    %43 = vector.extract_strided_slice %38 {offsets = [0, 96], sizes = [2, 32], strides = [1, 1]} : vector<2x128xf32> to vector<2x32xf32>
    %44 = arith.mulf %41, %27 : vector<2x32xf32>
    %45 = arith.mulf %40, %42 : vector<2x32xf32>
    %46 = arith.addf %44, %45 : vector<2x32xf32>
    %47 = math.tanh %46 : vector<2x32xf32>
    %48 = arith.mulf %43, %47 : vector<2x32xf32>
    %49 = vector.extract_strided_slice %7 {offsets = [0, 2, 0], sizes = [2, 1, 128], strides = [1, 1, 1]} : vector<2x8x128xf32> to vector<2x1x128xf32>
    %50 = vector.shape_cast %49 : vector<2x1x128xf32> to vector<2x128xf32>
    %cst_14 = arith.constant dense<0.000000e+00> : vector<2x128xf32>
    %51 = tpu.matmul %48, %8, %cst_14 {dimension_numbers = #tpu.dot_dimension_numbers<[1], [0], [0], [1], [0, 0, 1, 1], [], []>} : vector<2x32xf32>, vector<32x128xf32>, vector<2x128xf32> -> vector<2x128xf32>
    %52 = arith.addf %50, %51 : vector<2x128xf32>
    %53 = arith.negf %52 : vector<2x128xf32>
    %54 = math.exp %53 : vector<2x128xf32>
    %cst_15 = arith.constant 1.000000e+00 : f32
    %55 = vector.broadcast %cst_15 : f32 to vector<2x128xf32>
    %56 = arith.addf %55, %54 : vector<2x128xf32>
    %57 = arith.divf %55, %56 : vector<2x128xf32>
    %58 = math.tanh %52 : vector<2x128xf32>
    %59 = vector.extract_strided_slice %57 {offsets = [0, 0], sizes = [2, 32], strides = [1, 1]} : vector<2x128xf32> to vector<2x32xf32>
    %60 = vector.extract_strided_slice %57 {offsets = [0, 32], sizes = [2, 32], strides = [1, 1]} : vector<2x128xf32> to vector<2x32xf32>
    %61 = vector.extract_strided_slice %58 {offsets = [0, 64], sizes = [2, 32], strides = [1, 1]} : vector<2x128xf32> to vector<2x32xf32>
    %62 = vector.extract_strided_slice %57 {offsets = [0, 96], sizes = [2, 32], strides = [1, 1]} : vector<2x128xf32> to vector<2x32xf32>
    %63 = arith.mulf %60, %46 : vector<2x32xf32>
    %64 = arith.mulf %59, %61 : vector<2x32xf32>
    %65 = arith.addf %63, %64 : vector<2x32xf32>
    %66 = math.tanh %65 : vector<2x32xf32>
    %67 = arith.mulf %62, %66 : vector<2x32xf32>
    %68 = vector.extract_strided_slice %7 {offsets = [0, 3, 0], sizes = [2, 1, 128], strides = [1, 1, 1]} : vector<2x8x128xf32> to vector<2x1x128xf32>
    %69 = vector.shape_cast %68 : vector<2x1x128xf32> to vector<2x128xf32>
    %cst_16 = arith.constant dense<0.000000e+00> : vector<2x128xf32>
    %70 = tpu.matmul %67, %8, %cst_16 {dimension_numbers = #tpu.dot_dimension_numbers<[1], [0], [0], [1], [0, 0, 1, 1], [], []>} : vector<2x32xf32>, vector<32x128xf32>, vector<2x128xf32> -> vector<2x128xf32>
    %71 = arith.addf %69, %70 : vector<2x128xf32>
    %72 = arith.negf %71 : vector<2x128xf32>
    %73 = math.exp %72 : vector<2x128xf32>
    %cst_17 = arith.constant 1.000000e+00 : f32
    %74 = vector.broadcast %cst_17 : f32 to vector<2x128xf32>
    %75 = arith.addf %74, %73 : vector<2x128xf32>
    %76 = arith.divf %74, %75 : vector<2x128xf32>
    %77 = math.tanh %71 : vector<2x128xf32>
    %78 = vector.extract_strided_slice %76 {offsets = [0, 0], sizes = [2, 32], strides = [1, 1]} : vector<2x128xf32> to vector<2x32xf32>
    %79 = vector.extract_strided_slice %76 {offsets = [0, 32], sizes = [2, 32], strides = [1, 1]} : vector<2x128xf32> to vector<2x32xf32>
    %80 = vector.extract_strided_slice %77 {offsets = [0, 64], sizes = [2, 32], strides = [1, 1]} : vector<2x128xf32> to vector<2x32xf32>
    %81 = vector.extract_strided_slice %76 {offsets = [0, 96], sizes = [2, 32], strides = [1, 1]} : vector<2x128xf32> to vector<2x32xf32>
    %82 = arith.mulf %79, %65 : vector<2x32xf32>
    %83 = arith.mulf %78, %80 : vector<2x32xf32>
    %84 = arith.addf %82, %83 : vector<2x32xf32>
    %85 = math.tanh %84 : vector<2x32xf32>
    %86 = arith.mulf %81, %85 : vector<2x32xf32>
    %87 = vector.extract_strided_slice %7 {offsets = [0, 4, 0], sizes = [2, 1, 128], strides = [1, 1, 1]} : vector<2x8x128xf32> to vector<2x1x128xf32>
    %88 = vector.shape_cast %87 : vector<2x1x128xf32> to vector<2x128xf32>
    %cst_18 = arith.constant dense<0.000000e+00> : vector<2x128xf32>
    %89 = tpu.matmul %86, %8, %cst_18 {dimension_numbers = #tpu.dot_dimension_numbers<[1], [0], [0], [1], [0, 0, 1, 1], [], []>} : vector<2x32xf32>, vector<32x128xf32>, vector<2x128xf32> -> vector<2x128xf32>
    %90 = arith.addf %88, %89 : vector<2x128xf32>
    %91 = arith.negf %90 : vector<2x128xf32>
    %92 = math.exp %91 : vector<2x128xf32>
    %cst_19 = arith.constant 1.000000e+00 : f32
    %93 = vector.broadcast %cst_19 : f32 to vector<2x128xf32>
    %94 = arith.addf %93, %92 : vector<2x128xf32>
    %95 = arith.divf %93, %94 : vector<2x128xf32>
    %96 = math.tanh %90 : vector<2x128xf32>
    %97 = vector.extract_strided_slice %95 {offsets = [0, 0], sizes = [2, 32], strides = [1, 1]} : vector<2x128xf32> to vector<2x32xf32>
    %98 = vector.extract_strided_slice %95 {offsets = [0, 32], sizes = [2, 32], strides = [1, 1]} : vector<2x128xf32> to vector<2x32xf32>
    %99 = vector.extract_strided_slice %96 {offsets = [0, 64], sizes = [2, 32], strides = [1, 1]} : vector<2x128xf32> to vector<2x32xf32>
    %100 = vector.extract_strided_slice %95 {offsets = [0, 96], sizes = [2, 32], strides = [1, 1]} : vector<2x128xf32> to vector<2x32xf32>
    %101 = arith.mulf %98, %84 : vector<2x32xf32>
    %102 = arith.mulf %97, %99 : vector<2x32xf32>
    %103 = arith.addf %101, %102 : vector<2x32xf32>
    %104 = math.tanh %103 : vector<2x32xf32>
    %105 = arith.mulf %100, %104 : vector<2x32xf32>
    %106 = vector.extract_strided_slice %7 {offsets = [0, 5, 0], sizes = [2, 1, 128], strides = [1, 1, 1]} : vector<2x8x128xf32> to vector<2x1x128xf32>
    %107 = vector.shape_cast %106 : vector<2x1x128xf32> to vector<2x128xf32>
    %cst_20 = arith.constant dense<0.000000e+00> : vector<2x128xf32>
    %108 = tpu.matmul %105, %8, %cst_20 {dimension_numbers = #tpu.dot_dimension_numbers<[1], [0], [0], [1], [0, 0, 1, 1], [], []>} : vector<2x32xf32>, vector<32x128xf32>, vector<2x128xf32> -> vector<2x128xf32>
    %109 = arith.addf %107, %108 : vector<2x128xf32>
    %110 = arith.negf %109 : vector<2x128xf32>
    %111 = math.exp %110 : vector<2x128xf32>
    %cst_21 = arith.constant 1.000000e+00 : f32
    %112 = vector.broadcast %cst_21 : f32 to vector<2x128xf32>
    %113 = arith.addf %112, %111 : vector<2x128xf32>
    %114 = arith.divf %112, %113 : vector<2x128xf32>
    %115 = math.tanh %109 : vector<2x128xf32>
    %116 = vector.extract_strided_slice %114 {offsets = [0, 0], sizes = [2, 32], strides = [1, 1]} : vector<2x128xf32> to vector<2x32xf32>
    %117 = vector.extract_strided_slice %114 {offsets = [0, 32], sizes = [2, 32], strides = [1, 1]} : vector<2x128xf32> to vector<2x32xf32>
    %118 = vector.extract_strided_slice %115 {offsets = [0, 64], sizes = [2, 32], strides = [1, 1]} : vector<2x128xf32> to vector<2x32xf32>
    %119 = vector.extract_strided_slice %114 {offsets = [0, 96], sizes = [2, 32], strides = [1, 1]} : vector<2x128xf32> to vector<2x32xf32>
    %120 = arith.mulf %117, %103 : vector<2x32xf32>
    %121 = arith.mulf %116, %118 : vector<2x32xf32>
    %122 = arith.addf %120, %121 : vector<2x32xf32>
    %123 = math.tanh %122 : vector<2x32xf32>
    %124 = arith.mulf %119, %123 : vector<2x32xf32>
    %125 = vector.extract_strided_slice %7 {offsets = [0, 6, 0], sizes = [2, 1, 128], strides = [1, 1, 1]} : vector<2x8x128xf32> to vector<2x1x128xf32>
    %126 = vector.shape_cast %125 : vector<2x1x128xf32> to vector<2x128xf32>
    %cst_22 = arith.constant dense<0.000000e+00> : vector<2x128xf32>
    %127 = tpu.matmul %124, %8, %cst_22 {dimension_numbers = #tpu.dot_dimension_numbers<[1], [0], [0], [1], [0, 0, 1, 1], [], []>} : vector<2x32xf32>, vector<32x128xf32>, vector<2x128xf32> -> vector<2x128xf32>
    %128 = arith.addf %126, %127 : vector<2x128xf32>
    %129 = arith.negf %128 : vector<2x128xf32>
    %130 = math.exp %129 : vector<2x128xf32>
    %cst_23 = arith.constant 1.000000e+00 : f32
    %131 = vector.broadcast %cst_23 : f32 to vector<2x128xf32>
    %132 = arith.addf %131, %130 : vector<2x128xf32>
    %133 = arith.divf %131, %132 : vector<2x128xf32>
    %134 = math.tanh %128 : vector<2x128xf32>
    %135 = vector.extract_strided_slice %133 {offsets = [0, 0], sizes = [2, 32], strides = [1, 1]} : vector<2x128xf32> to vector<2x32xf32>
    %136 = vector.extract_strided_slice %133 {offsets = [0, 32], sizes = [2, 32], strides = [1, 1]} : vector<2x128xf32> to vector<2x32xf32>
    %137 = vector.extract_strided_slice %134 {offsets = [0, 64], sizes = [2, 32], strides = [1, 1]} : vector<2x128xf32> to vector<2x32xf32>
    %138 = vector.extract_strided_slice %133 {offsets = [0, 96], sizes = [2, 32], strides = [1, 1]} : vector<2x128xf32> to vector<2x32xf32>
    %139 = arith.mulf %136, %122 : vector<2x32xf32>
    %140 = arith.mulf %135, %137 : vector<2x32xf32>
    %141 = arith.addf %139, %140 : vector<2x32xf32>
    %142 = math.tanh %141 : vector<2x32xf32>
    %143 = arith.mulf %138, %142 : vector<2x32xf32>
    %144 = vector.extract_strided_slice %7 {offsets = [0, 7, 0], sizes = [2, 1, 128], strides = [1, 1, 1]} : vector<2x8x128xf32> to vector<2x1x128xf32>
    %145 = vector.shape_cast %144 : vector<2x1x128xf32> to vector<2x128xf32>
    %cst_24 = arith.constant dense<0.000000e+00> : vector<2x128xf32>
    %146 = tpu.matmul %143, %8, %cst_24 {dimension_numbers = #tpu.dot_dimension_numbers<[1], [0], [0], [1], [0, 0, 1, 1], [], []>} : vector<2x32xf32>, vector<32x128xf32>, vector<2x128xf32> -> vector<2x128xf32>
    %147 = arith.addf %145, %146 : vector<2x128xf32>
    %148 = arith.negf %147 : vector<2x128xf32>
    %149 = math.exp %148 : vector<2x128xf32>
    %cst_25 = arith.constant 1.000000e+00 : f32
    %150 = vector.broadcast %cst_25 : f32 to vector<2x128xf32>
    %151 = arith.addf %150, %149 : vector<2x128xf32>
    %152 = arith.divf %150, %151 : vector<2x128xf32>
    %153 = math.tanh %147 : vector<2x128xf32>
    %154 = vector.extract_strided_slice %152 {offsets = [0, 0], sizes = [2, 32], strides = [1, 1]} : vector<2x128xf32> to vector<2x32xf32>
    %155 = vector.extract_strided_slice %152 {offsets = [0, 32], sizes = [2, 32], strides = [1, 1]} : vector<2x128xf32> to vector<2x32xf32>
    %156 = vector.extract_strided_slice %153 {offsets = [0, 64], sizes = [2, 32], strides = [1, 1]} : vector<2x128xf32> to vector<2x32xf32>
    %157 = vector.extract_strided_slice %152 {offsets = [0, 96], sizes = [2, 32], strides = [1, 1]} : vector<2x128xf32> to vector<2x32xf32>
    %158 = arith.mulf %155, %141 : vector<2x32xf32>
    %159 = arith.mulf %154, %156 : vector<2x32xf32>
    %160 = arith.addf %158, %159 : vector<2x32xf32>
    %161 = math.tanh %160 : vector<2x32xf32>
    %162 = arith.mulf %157, %161 : vector<2x32xf32>
    %c0_26 = arith.constant 0 : index
    %c0_27 = arith.constant 0 : index
    %163 = vector.load %arg4[%c0_26, %c0_27] : memref<32x16xf32, #tpu.memory_space<vmem>>, vector<32x16xf32>
    %cst_28 = arith.constant dense<0.000000e+00> : vector<2x16xf32>
    %164 = tpu.matmul %162, %163, %cst_28 {dimension_numbers = #tpu.dot_dimension_numbers<[1], [0], [0], [1], [0, 0, 1, 1], [], []>} : vector<2x32xf32>, vector<32x16xf32>, vector<2x16xf32> -> vector<2x16xf32>
    %c0_29 = arith.constant 0 : index
    %c0_30 = arith.constant 0 : index
    %165 = vector.load %arg5[%c0_29, %c0_30] : memref<1x16xf32, #tpu.memory_space<vmem>>, vector<1x16xf32>
    %166 = vector.broadcast %165 : vector<1x16xf32> to vector<2x16xf32>
    %167 = arith.addf %164, %166 : vector<2x16xf32>
    %cst_31 = arith.constant 0.000000e+00 : f32
    %168 = vector.broadcast %cst_31 : f32 to vector<2x16xf32>
    %169 = arith.maximumf %167, %168 : vector<2x16xf32>
    %c0_32 = arith.constant 0 : index
    %c0_33 = arith.constant 0 : index
    %170 = vector.load %arg6[%c0_32, %c0_33] : memref<16x1xf32, #tpu.memory_space<vmem>>, vector<16x1xf32>
    %cst_34 = arith.constant dense<0.000000e+00> : vector<2x1xf32>
    %171 = tpu.matmul %169, %170, %cst_34 {dimension_numbers = #tpu.dot_dimension_numbers<[1], [0], [0], [1], [0, 0, 1, 1], [], []>} : vector<2x16xf32>, vector<16x1xf32>, vector<2x1xf32> -> vector<2x1xf32>
    %c0_35 = arith.constant 0 : index
    %c0_36 = arith.constant 0 : index
    %172 = vector.load %arg7[%c0_35, %c0_36] : memref<1x1xf32, #tpu.memory_space<vmem>>, vector<1x1xf32>
    %173 = vector.broadcast %172 : vector<1x1xf32> to vector<2x1xf32>
    %174 = arith.addf %171, %173 : vector<2x1xf32>
    %175 = arith.negf %174 : vector<2x1xf32>
    %176 = math.exp %175 : vector<2x1xf32>
    %cst_37 = arith.constant 1.000000e+00 : f32
    %177 = vector.broadcast %cst_37 : f32 to vector<2x1xf32>
    %178 = arith.addf %177, %176 : vector<2x1xf32>
    %179 = arith.divf %177, %178 : vector<2x1xf32>
    %c0_38 = arith.constant 0 : index
    %c0_39 = arith.constant 0 : index
    %180 = vector.load %arg8[%c0_38, %c0_39] : memref<2x1xf32, #tpu.memory_space<vmem>>, vector<2x1xf32>
    tpu.vector_store %arg8[%c0_38, %c0_39], %179 {strides = array<i32>} : memref<2x1xf32, #tpu.memory_space<vmem>>, vector<2x1xf32>,
    return
  }
}

</mosaic_0001>

<llo_original>
// kernel: tpu_custom_call.1
$region0: #{tpu_custom_call.1}
  #allocation0 [shape = 'u32[]', space=smem, size = 0x4, offset = 0x4, fixed_abs, tag = 'smem constant byte address 0x4 - core index']
  #allocation1 [shape = 'u32[72,128]{1,0:T(1,128)}', space=vmem, size = 0x9000, scoped, tag = 'internal scratch']
  #allocation2 [shape = 'f32[1,1]{1,0:T(1,128)S(1)}', space=vmem, size = 0x200, scoped, tag = 'scoped memory for tpu_custom_call.1']
  %s0 = inlined_call_operand.vmem [shape: f32[2,8,32], index: 0, kind: input, shape index: {}]
  %s1 = inlined_call_operand.vmem [shape: f32[32,128], index: 1, kind: input, shape index: {}]
  %s2 = inlined_call_operand.hbm [shape: f32[32,128], index: 2, kind: input, shape index: {}]
  %s3 = inlined_call_operand.vmem [shape: f32[1,128], index: 3, kind: input, shape index: {}]
  %s4 = inlined_call_operand.vmem [shape: f32[32,16], index: 4, kind: input, shape index: {}]
  %s5 = inlined_call_operand.vmem [shape: f32[1,16], index: 5, kind: input, shape index: {}]
  %s6 = inlined_call_operand.vmem [shape: f32[16,1], index: 6, kind: input, shape index: {}]
  %s7 = inlined_call_operand.<no memory space> [shape: f32[1,1], index: 7, kind: input, shape index: {}]
  %s8 = inlined_call_operand.vmem [shape: f32[2,1], index: 8, kind: output, shape index: {}]
  %s9 = sld [smem:[#allocation0]]
  $region46: #{tpu_custom_call.1} parent=0
    _
  %s11 = ssub.s32 1, %s9
  %s12 = scalar_select 0, %s11, %s9
  %v13 = vstv %s7
  %14 = vst [vmem:[#allocation2] sm:$0x1] %v13
  $region1: #{tpu_custom_call.1} parent=0
    #allocation3 [shape = 'u8[16384]{0}', space=vmem, size = 0x4000, scoped, tag = 'input window, operand 2, single buffered']
    #allocation4 [shape = 's32[1]{0}', space=sflag, size = 0x4, scoped, tag = 'scoped memory for tpu_custom_call.1']
    %15 = vsyncpa [#allocation4], 0
    // Predicated region
    $region2: #{tpu_custom_call.1} parent=1 // pred_check
      _
    $region3: #{tpu_custom_call.1} parent=1 // pred_check_branch
      %17 = sbr.rel (0) target = $region5
    $region4: #{tpu_custom_call.1} parent=1 // pred_region
      _
    $region5: #{tpu_custom_call.1} parent=1 // pred_fallthru
      _
    // Predicated region
    $region6: #{tpu_custom_call.1} parent=1 // pred_check
      _
    $region7: #{tpu_custom_call.1} parent=1 // pred_check_branch
      %19 = sbr.rel (0) target = $region9
    $region8: #{tpu_custom_call.1} parent=1 // pred_region
      _
    $region9: #{tpu_custom_call.1} parent=1 // pred_fallthru
      _
    // Predicated region
    $region10: #{tpu_custom_call.1} parent=1 // pred_check
      _
    $region11: #{tpu_custom_call.1} parent=1 // pred_check_branch
      %21 = sbr.rel (0) target = $region13
    $region12: #{tpu_custom_call.1} parent=1 // pred_region
      %23 = vsyncadd [#allocation4], 0
      %s24 = sshll.u32 %s2, 4
      %s25 = int_to_ptr.hbm [resolvable:$true] %s24
      %s26 = sshll.u32 [#allocation3], 4
      %s27 = int_to_ptr.vmem [resolvable:$true] %s26
      %32 = dma.hbm_to_vmem [thread:$0]  %s25, 512, %s27, [#allocation4], 128, 128, 8
    $region13: #{tpu_custom_call.1} parent=1 // pred_fallthru
      _
    // Predicated region
    $region14: #{tpu_custom_call.1} parent=1 // pred_check
      _
    $region15: #{tpu_custom_call.1} parent=1 // pred_check_branch
      %34 = sbr.rel (0) target = $region17
    $region16: #{tpu_custom_call.1} parent=1 // pred_region
      _
    $region17: #{tpu_custom_call.1} parent=1 // pred_fallthru
      _
    // Predicated region
    $region18: #{tpu_custom_call.1} parent=1 // pred_check
      _
    $region19: #{tpu_custom_call.1} parent=1 // pred_check_branch
      %36 = sbr.rel (0) target = $region21
    $region20: #{tpu_custom_call.1} parent=1 // pred_region
      _
    $region21: #{tpu_custom_call.1} parent=1 // pred_fallthru
      _
    // Predicated region
    $region22: #{tpu_custom_call.1} parent=1 // pred_check
      _
    $region23: #{tpu_custom_call.1} parent=1 // pred_check_branch
      %38 = sbr.rel (0) target = $region25
    $region24: #{tpu_custom_call.1} parent=1 // pred_region
      _
    $region25: #{tpu_custom_call.1} parent=1 // pred_fallthru
      _
    // Predicated region
    $region26: #{tpu_custom_call.1} parent=1 // pred_check
      _
    $region27: #{tpu_custom_call.1} parent=1 // pred_check_branch
      %40 = sbr.rel (0) target = $region29
    $region28: #{tpu_custom_call.1} parent=1 // pred_region
      _
    $region29: #{tpu_custom_call.1} parent=1 // pred_fallthru
      _
    // Predicated region
    $region30: #{tpu_custom_call.1} parent=1 // pred_check
      _
    $region31: #{tpu_custom_call.1} parent=1 // pred_check_branch
      %42 = sbr.rel (0) target = $region33
    $region32: #{tpu_custom_call.1} parent=1 // pred_region
      _
    $region33: #{tpu_custom_call.1} parent=1 // pred_fallthru
      _
    // Predicated region
    $region34: #{tpu_custom_call.1} parent=1 // pred_check
      _
    $region35: #{tpu_custom_call.1} parent=1 // pred_check_branch
      %44 = sbr.rel (0) target = $region37
    $region36: #{tpu_custom_call.1} parent=1 // pred_region
      %46 = dma.done [#allocation4], 512
    $region37: #{tpu_custom_call.1} parent=1 // pred_fallthru
      _
    %v47 = vld [vmem:[%s0] sm:$0xff]
    %v48 = vld [vmem:[%s0 + $0x8] sm:$0xff]
    %v49 = vld [vmem:[%s1] sm:$0xff]
    %v50 = vld [vmem:[%s1 + $0x8] sm:$0xff]
    %v51 = vld [vmem:[%s1 + $0x10] sm:$0xff]
    %v52 = vld [vmem:[%s1 + $0x18] sm:$0xff]
    %v53 = vld [vmem:[%s3] sm:$0x1]
    %v55 = vperm.slane %v53, 0
    %vm57 = vcmask 261120
    %v59 = vsel %vm57, %v47, 0
    %v62 = vsel %vm57, %v48, 0
    %64 = vmatpush.msra.mxu0 0.0
    %65 = vmatpush.msra.mxu0 0.0
    %66 = vmatpush.msra.mxu0 0.0
    %67 = vmatpush.msra.mxu0 0.0
    %68 = vmatpush.msra.mxu0 0.0
    %69 = vmatpush.msra.mxu0 0.0
    %70 = vmatpush.msra.mxu0 0.0
    %71 = vmatpush.msra.mxu0 0.0
    %72 = vmatpush.msra.mxu0 0.0
    %73 = vmatpush.msra.mxu0 0.0
    %74 = vmatpush.msra.mxu0 0.0
    %75 = vmatpush.msra.mxu0 0.0
    %76 = vmatpush.msra.mxu0 %v52
    %77 = vmatpush.msra.mxu0 %v51
    %78 = vmatpush.msra.mxu0 %v50
    %79 = vmatpush.msra.mxu0 %v49
    %80 = vmatmul.f32.gmra.mxu0 %v59
    %v81 = vpop.f32.mrf.mxu0
    %v82 = vadd.f32 %v55, %v81
    %83 = vmatmul.f32.gmra.mxu0 %v62
    %v84 = vpop.f32.mrf.mxu0
    %v85 = vadd.f32 %v55, %v84
    %86 = vdwg.mxu0
    %v87 = vld [vmem:[#allocation3] sm:$0xff]
    %v88 = vld [vmem:[#allocation3 + $0x8] sm:$0xff]
    %v89 = vld [vmem:[#allocation3 + $0x10] sm:$0xff]
    %v90 = vld [vmem:[#allocation3 + $0x18] sm:$0xff]
    %v92 = vsel %vm57, 0.0, 0
    %94 = vmatpush.msra.mxu0 0.0
    %95 = vmatpush.msra.mxu0 0.0
    %96 = vmatpush.msra.mxu0 0.0
    %97 = vmatpush.msra.mxu0 0.0
    %98 = vmatpush.msra.mxu0 0.0
    %99 = vmatpush.msra.mxu0 0.0
    %100 = vmatpush.msra.mxu0 0.0
    %101 = vmatpush.msra.mxu0 0.0
    %102 = vmatpush.msra.mxu0 0.0
    %103 = vmatpush.msra.mxu0 0.0
    %104 = vmatpush.msra.mxu0 0.0
    %105 = vmatpush.msra.mxu0 0.0
    %106 = vmatpush.msra.mxu0 %v90
    %107 = vmatpush.msra.mxu0 %v89
    %108 = vmatpush.msra.mxu0 %v88
    %109 = vmatpush.msra.mxu0 %v87
    %110 = vmatmul.f32.gmra.mxu0 %v92
    %v111 = vpop.f32.mrf.mxu0
    %v112 = vadd.f32 0.0, %v111
    %113 = vdwg.mxu0
    %v115 = vrot.slane %v112, 1
    %v118 = vadd.f32 %v82, %v112
    %v119 = vadd.f32 %v85, %v115
    %v120 = vxor.u32 %v118, 2147483648
    %v121 = vxor.u32 %v119, 2147483648
    %v122 = vmul.f32 %v120, 1.442695
    %v123 = vpow.pop %v122
    %v124 = vmul.f32 %v121, 1.442695
    %v125 = vpow.pop %v124
    %v126 = vadd.f32 %v123, 1.0
    %v127 = vadd.f32 %v125, 1.0
    %v128 = vrcp.pop %v126
    %v129 = vmul.f32 %v126, %v128
    %v130 = vsub.f32 1.0, %v129
    %v131 = vmul.f32 %v128, %v130
    %v132 = vadd.f32 %v128, %v131
    %vm133 = vweird.f32 %v126
    %vm134 = vweird.f32 %v128
    %vm135 = vmor %vm133, %vm134
    %v136 = vsel %vm135, %v128, %v132
    %v137 = vand.u32 2147483647, %v126
    %vm138 = vcmp.eq.f32.partialorder %v137, 8.507059e+37
    %v139 = vand.u32 %v126, 2147483648
    %v140 = vor.u32 1.1754944e-38, %v139
    %v141 = vsel %vm138, %v140, %v136
    %v142 = vmul.f32 1.0, %v141
    %v143 = vrcp.pop %v127
    %v144 = vmul.f32 %v127, %v143
    %v145 = vsub.f32 1.0, %v144
    %v146 = vmul.f32 %v143, %v145
    %v147 = vadd.f32 %v143, %v146
    %vm148 = vweird.f32 %v127
    %vm149 = vweird.f32 %v143
    %vm150 = vmor %vm148, %vm149
    %v151 = vsel %vm150, %v143, %v147
    %v152 = vand.u32 2147483647, %v127
    %vm153 = vcmp.eq.f32.partialorder %v152, 8.507059e+37
    %v154 = vand.u32 %v127, 2147483648
    %v155 = vor.u32 1.1754944e-38, %v154
    %v156 = vsel %vm153, %v155, %v151
    %v157 = vmul.f32 1.0, %v156
    %v158 = vtanh.pop %v118
    %v159 = vtanh.pop %v119
    %v160 = vmul.f32 %v142, 0.0
    %v161 = vmul.f32 %v157, 0.0
    %164 = vrot.lane.b32.xlu0 %v158, 64
    %v165 = vpop.permute.xlu0 %164
    %166 = vrot.lane.b32.xlu0 %v159, 64
    %v167 = vpop.permute.xlu0 %166
    %v170 = vmul.f32 %v142, %v165
    %v171 = vmul.f32 %v157, %v167
    %174 = vrot.lane.b32.xlu0 %v170, 32
    %v175 = vpop.permute.xlu0 %174
    %176 = vrot.lane.b32.xlu0 %v171, 32
    %v177 = vpop.permute.xlu0 %176
    %v180 = vadd.f32 %v160, %v175
    %v181 = vadd.f32 %v161, %v177
    %v182 = vtanh.pop %v180
    %v183 = vtanh.pop %v181
    %186 = vrot.lane.b32.xlu0 %v182, 64
    %v187 = vpop.permute.xlu0 %186
    %188 = vrot.lane.b32.xlu0 %v183, 64
    %v189 = vpop.permute.xlu0 %188
    %v192 = vmul.f32 %v142, %v187
    %v193 = vmul.f32 %v157, %v189
    %v196 = vrot.slane %v193, 7
    %vm197 = vcmask 1041409
    %v198 = vsel %vm197, %v196, %v192
    %199 = vrot.lane.b32.xlu0 %v198, 32
    %v200 = vpop.permute.xlu0 %199
    %v201 = vsel %vm57, %v200, 0
    %203 = vmatpush.msra.mxu0 0.0
    %204 = vmatpush.msra.mxu0 0.0
    %205 = vmatpush.msra.mxu0 0.0
    %206 = vmatpush.msra.mxu0 0.0
    %207 = vmatpush.msra.mxu0 0.0
    %208 = vmatpush.msra.mxu0 0.0
    %209 = vmatpush.msra.mxu0 0.0
    %210 = vmatpush.msra.mxu0 0.0
    %211 = vmatpush.msra.mxu0 0.0
    %212 = vmatpush.msra.mxu0 0.0
    %213 = vmatpush.msra.mxu0 0.0
    %214 = vmatpush.msra.mxu0 0.0
    %215 = vmatpush.msra.mxu0 %v90
    %216 = vmatpush.msra.mxu0 %v89
    %217 = vmatpush.msra.mxu0 %v88
    %218 = vmatpush.msra.mxu0 %v87
    %219 = vmatmul.f32.gmra.mxu0 %v201
    %v220 = vpop.f32.mrf.mxu0
    %v221 = vadd.f32 0.0, %v220
    %222 = vdwg.mxu0
    %v224 = vrot.slane %v221, 7
    %v227 = vadd.f32 %v82, %v224
    %v228 = vadd.f32 %v85, %v221
    %v229 = vxor.u32 %v227, 2147483648
    %v230 = vxor.u32 %v228, 2147483648
    %v231 = vmul.f32 %v229, 1.442695
    %v232 = vpow.pop %v231
    %v233 = vmul.f32 %v230, 1.442695
    %v234 = vpow.pop %v233
    %v235 = vadd.f32 %v232, 1.0
    %v236 = vadd.f32 %v234, 1.0
    %v237 = vrcp.pop %v235
    %v238 = vmul.f32 %v235, %v237
    %v239 = vsub.f32 1.0, %v238
    %v240 = vmul.f32 %v237, %v239
    %v241 = vadd.f32 %v237, %v240
    %vm242 = vweird.f32 %v235
    %vm243 = vweird.f32 %v237
    %vm244 = vmor %vm242, %vm243
    %v245 = vsel %vm244, %v237, %v241
    %v246 = vand.u32 2147483647, %v235
    %vm247 = vcmp.eq.f32.partialorder %v246, 8.507059e+37
    %v248 = vand.u32 %v235, 2147483648
    %v249 = vor.u32 1.1754944e-38, %v248
    %v250 = vsel %vm247, %v249, %v245
    %v251 = vmul.f32 1.0, %v250
    %v252 = vrcp.pop %v236
    %v253 = vmul.f32 %v236, %v252
    %v254 = vsub.f32 1.0, %v253
    %v255 = vmul.f32 %v252, %v254
    %v256 = vadd.f32 %v252, %v255
    %vm257 = vweird.f32 %v236
    %vm258 = vweird.f32 %v252
    %vm259 = vmor %vm257, %vm258
    %v260 = vsel %vm259, %v252, %v256
    %v261 = vand.u32 2147483647, %v236
    %vm262 = vcmp.eq.f32.partialorder %v261, 8.507059e+37
    %v263 = vand.u32 %v236, 2147483648
    %v264 = vor.u32 1.1754944e-38, %v263
    %v265 = vsel %vm262, %v264, %v260
    %v266 = vmul.f32 1.0, %v265
    %v267 = vtanh.pop %v227
    %v268 = vtanh.pop %v228
    %v271 = vrot.slane %v180, 7
    %v272 = vrot.slane %v181, 7
    %v275 = vmul.f32 %v251, %v271
    %v276 = vmul.f32 %v266, %v272
    %279 = vrot.lane.b32.xlu0 %v267, 64
    %v280 = vpop.permute.xlu0 %279
    %281 = vrot.lane.b32.xlu0 %v268, 64
    %v282 = vpop.permute.xlu0 %281
    %v285 = vmul.f32 %v251, %v280
    %v286 = vmul.f32 %v266, %v282
    %289 = vrot.lane.b32.xlu0 %v285, 32
    %v290 = vpop.permute.xlu0 %289
    %291 = vrot.lane.b32.xlu0 %v286, 32
    %v292 = vpop.permute.xlu0 %291
    %v295 = vadd.f32 %v275, %v290
    %v296 = vadd.f32 %v276, %v292
    %v297 = vtanh.pop %v295
    %v298 = vtanh.pop %v296
    %301 = vrot.lane.b32.xlu0 %v297, 64
    %v302 = vpop.permute.xlu0 %301
    %303 = vrot.lane.b32.xlu0 %v298, 64
    %v304 = vpop.permute.xlu0 %303
    %v307 = vmul.f32 %v251, %v302
    %v308 = vmul.f32 %v266, %v304
    %v311 = vrot.slane %v307, 1
    %v312 = vsel %vm197, %v308, %v311
    %313 = vrot.lane.b32.xlu0 %v312, 32
    %v314 = vpop.permute.xlu0 %313
    %v315 = vsel %vm57, %v314, 0
    %317 = vmatpush.msra.mxu0 0.0
    %318 = vmatpush.msra.mxu0 0.0
    %319 = vmatpush.msra.mxu0 0.0
    %320 = vmatpush.msra.mxu0 0.0
    %321 = vmatpush.msra.mxu0 0.0
    %322 = vmatpush.msra.mxu0 0.0
    %323 = vmatpush.msra.mxu0 0.0
    %324 = vmatpush.msra.mxu0 0.0
    %325 = vmatpush.msra.mxu0 0.0
    %326 = vmatpush.msra.mxu0 0.0
    %327 = vmatpush.msra.mxu0 0.0
    %328 = vmatpush.msra.mxu0 0.0
    %329 = vmatpush.msra.mxu0 %v90
    %330 = vmatpush.msra.mxu0 %v89
    %331 = vmatpush.msra.mxu0 %v88
    %332 = vmatpush.msra.mxu0 %v87
    %333 = vmatmul.f32.gmra.mxu0 %v315
    %v334 = vpop.f32.mrf.mxu0
    %v335 = vadd.f32 0.0, %v334
    %336 = vdwg.mxu0
    %v338 = vrot.slane %v335, 6
    %v339 = vrot.slane %v335, 7
    %v342 = vadd.f32 %v82, %v338
    %v343 = vadd.f32 %v85, %v339
    %v344 = vxor.u32 %v342, 2147483648
    %v345 = vxor.u32 %v343, 2147483648
    %v346 = vmul.f32 %v344, 1.442695
    %v347 = vpow.pop %v346
    %v348 = vmul.f32 %v345, 1.442695
    %v349 = vpow.pop %v348
    %v350 = vadd.f32 %v347, 1.0
    %v351 = vadd.f32 %v349, 1.0
    %v352 = vrcp.pop %v350
    %v353 = vmul.f32 %v350, %v352
    %v354 = vsub.f32 1.0, %v353
    %v355 = vmul.f32 %v352, %v354
    %v356 = vadd.f32 %v352, %v355
    %vm357 = vweird.f32 %v350
    %vm358 = vweird.f32 %v352
    %vm359 = vmor %vm357, %vm358
    %v360 = vsel %vm359, %v352, %v356
    %v361 = vand.u32 2147483647, %v350
    %vm362 = vcmp.eq.f32.partialorder %v361, 8.507059e+37
    %v363 = vand.u32 %v350, 2147483648
    %v364 = vor.u32 1.1754944e-38, %v363
    %v365 = vsel %vm362, %v364, %v360
    %v366 = vmul.f32 1.0, %v365
    %v367 = vrcp.pop %v351
    %v368 = vmul.f32 %v351, %v367
    %v369 = vsub.f32 1.0, %v368
    %v370 = vmul.f32 %v367, %v369
    %v371 = vadd.f32 %v367, %v370
    %vm372 = vweird.f32 %v351
    %vm373 = vweird.f32 %v367
    %vm374 = vmor %vm372, %vm373
    %v375 = vsel %vm374, %v367, %v371
    %v376 = vand.u32 2147483647, %v351
    %vm377 = vcmp.eq.f32.partialorder %v376, 8.507059e+37
    %v378 = vand.u32 %v351, 2147483648
    %v379 = vor.u32 1.1754944e-38, %v378
    %v380 = vsel %vm377, %v379, %v375
    %v381 = vmul.f32 1.0, %v380
    %v382 = vtanh.pop %v342
    %v383 = vtanh.pop %v343
    %v386 = vrot.slane %v295, 7
    %v387 = vrot.slane %v296, 7
    %v390 = vmul.f32 %v366, %v386
    %v391 = vmul.f32 %v381, %v387
    %394 = vrot.lane.b32.xlu0 %v382, 64
    %v395 = vpop.permute.xlu0 %394
    %396 = vrot.lane.b32.xlu0 %v383, 64
    %v397 = vpop.permute.xlu0 %396
    %v400 = vmul.f32 %v366, %v395
    %v401 = vmul.f32 %v381, %v397
    %404 = vrot.lane.b32.xlu0 %v400, 32
    %v405 = vpop.permute.xlu0 %404
    %406 = vrot.lane.b32.xlu0 %v401, 32
    %v407 = vpop.permute.xlu0 %406
    %v410 = vadd.f32 %v390, %v405
    %v411 = vadd.f32 %v391, %v407
    %v412 = vtanh.pop %v410
    %v413 = vtanh.pop %v411
    %416 = vrot.lane.b32.xlu0 %v412, 64
    %v417 = vpop.permute.xlu0 %416
    %418 = vrot.lane.b32.xlu0 %v413, 64
    %v419 = vpop.permute.xlu0 %418
    %v422 = vmul.f32 %v366, %v417
    %v423 = vmul.f32 %v381, %v419
    %v426 = vrot.slane %v422, 2
    %v427 = vrot.slane %v423, 1
    %v428 = vsel %vm197, %v427, %v426
    %429 = vrot.lane.b32.xlu0 %v428, 32
    %v430 = vpop.permute.xlu0 %429
    %v431 = vsel %vm57, %v430, 0
    %433 = vmatpush.msra.mxu0 0.0
    %434 = vmatpush.msra.mxu0 0.0
    %435 = vmatpush.msra.mxu0 0.0
    %436 = vmatpush.msra.mxu0 0.0
    %437 = vmatpush.msra.mxu0 0.0
    %438 = vmatpush.msra.mxu0 0.0
    %439 = vmatpush.msra.mxu0 0.0
    %440 = vmatpush.msra.mxu0 0.0
    %441 = vmatpush.msra.mxu0 0.0
    %442 = vmatpush.msra.mxu0 0.0
    %443 = vmatpush.msra.mxu0 0.0
    %444 = vmatpush.msra.mxu0 0.0
    %445 = vmatpush.msra.mxu0 %v90
    %446 = vmatpush.msra.mxu0 %v89
    %447 = vmatpush.msra.mxu0 %v88
    %448 = vmatpush.msra.mxu0 %v87
    %449 = vmatmul.f32.gmra.mxu0 %v431
    %v450 = vpop.f32.mrf.mxu0
    %v451 = vadd.f32 0.0, %v450
    %452 = vdwg.mxu0
    %v454 = vrot.slane %v451, 5
    %v455 = vrot.slane %v451, 6
    %v458 = vadd.f32 %v82, %v454
    %v459 = vadd.f32 %v85, %v455
    %v460 = vxor.u32 %v458, 2147483648
    %v461 = vxor.u32 %v459, 2147483648
    %v462 = vmul.f32 %v460, 1.442695
    %v463 = vpow.pop %v462
    %v464 = vmul.f32 %v461, 1.442695
    %v465 = vpow.pop %v464
    %v466 = vadd.f32 %v463, 1.0
    %v467 = vadd.f32 %v465, 1.0
    %v468 = vrcp.pop %v466
    %v469 = vmul.f32 %v466, %v468
    %v470 = vsub.f32 1.0, %v469
    %v471 = vmul.f32 %v468, %v470
    %v472 = vadd.f32 %v468, %v471
    %vm473 = vweird.f32 %v466
    %vm474 = vweird.f32 %v468
    %vm475 = vmor %vm473, %vm474
    %v476 = vsel %vm475, %v468, %v472
    %v477 = vand.u32 2147483647, %v466
    %vm478 = vcmp.eq.f32.partialorder %v477, 8.507059e+37
    %v479 = vand.u32 %v466, 2147483648
    %v480 = vor.u32 1.1754944e-38, %v479
    %v481 = vsel %vm478, %v480, %v476
    %v482 = vmul.f32 1.0, %v481
    %v483 = vrcp.pop %v467
    %v484 = vmul.f32 %v467, %v483
    %v485 = vsub.f32 1.0, %v484
    %v486 = vmul.f32 %v483, %v485
    %v487 = vadd.f32 %v483, %v486
    %vm488 = vweird.f32 %v467
    %vm489 = vweird.f32 %v483
    %vm490 = vmor %vm488, %vm489
    %v491 = vsel %vm490, %v483, %v487
    %v492 = vand.u32 2147483647, %v467
    %vm493 = vcmp.eq.f32.partialorder %v492, 8.507059e+37
    %v494 = vand.u32 %v467, 2147483648
    %v495 = vor.u32 1.1754944e-38, %v494
    %v496 = vsel %vm493, %v495, %v491
    %v497 = vmul.f32 1.0, %v496
    %v498 = vtanh.pop %v458
    %v499 = vtanh.pop %v459
    %v502 = vrot.slane %v410, 7
    %v503 = vrot.slane %v411, 7
    %v506 = vmul.f32 %v482, %v502
    %v507 = vmul.f32 %v497, %v503
    %510 = vrot.lane.b32.xlu0 %v498, 64
    %v511 = vpop.permute.xlu0 %510
    %512 = vrot.lane.b32.xlu0 %v499, 64
    %v513 = vpop.permute.xlu0 %512
    %v516 = vmul.f32 %v482, %v511
    %v517 = vmul.f32 %v497, %v513
    %520 = vrot.lane.b32.xlu0 %v516, 32
    %v521 = vpop.permute.xlu0 %520
    %522 = vrot.lane.b32.xlu0 %v517, 32
    %v523 = vpop.permute.xlu0 %522
    %v526 = vadd.f32 %v506, %v521
    %v527 = vadd.f32 %v507, %v523
    %v528 = vtanh.pop %v526
    %v529 = vtanh.pop %v527
    %532 = vrot.lane.b32.xlu0 %v528, 64
    %v533 = vpop.permute.xlu0 %532
    %534 = vrot.lane.b32.xlu0 %v529, 64
    %v535 = vpop.permute.xlu0 %534
    %v538 = vmul.f32 %v482, %v533
    %v539 = vmul.f32 %v497, %v535
    %v542 = vrot.slane %v538, 3
    %v543 = vrot.slane %v539, 2
    %v544 = vsel %vm197, %v543, %v542
    %545 = vrot.lane.b32.xlu0 %v544, 32
    %v546 = vpop.permute.xlu0 %545
    %v547 = vsel %vm57, %v546, 0
    %549 = vmatpush.msra.mxu0 0.0
    %550 = vmatpush.msra.mxu0 0.0
    %551 = vmatpush.msra.mxu0 0.0
    %552 = vmatpush.msra.mxu0 0.0
    %553 = vmatpush.msra.mxu0 0.0
    %554 = vmatpush.msra.mxu0 0.0
    %555 = vmatpush.msra.mxu0 0.0
    %556 = vmatpush.msra.mxu0 0.0
    %557 = vmatpush.msra.mxu0 0.0
    %558 = vmatpush.msra.mxu0 0.0
    %559 = vmatpush.msra.mxu0 0.0
    %560 = vmatpush.msra.mxu0 0.0
    %561 = vmatpush.msra.mxu0 %v90
    %562 = vmatpush.msra.mxu0 %v89
    %563 = vmatpush.msra.mxu0 %v88
    %564 = vmatpush.msra.mxu0 %v87
    %565 = vmatmul.f32.gmra.mxu0 %v547
    %v566 = vpop.f32.mrf.mxu0
    %v567 = vadd.f32 0.0, %v566
    %568 = vdwg.mxu0
    %v570 = vrot.slane %v567, 4
    %v571 = vrot.slane %v567, 5
    %v574 = vadd.f32 %v82, %v570
    %v575 = vadd.f32 %v85, %v571
    %v576 = vxor.u32 %v574, 2147483648
    %v577 = vxor.u32 %v575, 2147483648
    %v578 = vmul.f32 %v576, 1.442695
    %v579 = vpow.pop %v578
    %v580 = vmul.f32 %v577, 1.442695
    %v581 = vpow.pop %v580
    %v582 = vadd.f32 %v579, 1.0
    %v583 = vadd.f32 %v581, 1.0
    %v584 = vrcp.pop %v582
    %v585 = vmul.f32 %v582, %v584
    %v586 = vsub.f32 1.0, %v585
    %v587 = vmul.f32 %v584, %v586
    %v588 = vadd.f32 %v584, %v587
    %vm589 = vweird.f32 %v582
    %vm590 = vweird.f32 %v584
    %vm591 = vmor %vm589, %vm590
    %v592 = vsel %vm591, %v584, %v588
    %v593 = vand.u32 2147483647, %v582
    %vm594 = vcmp.eq.f32.partialorder %v593, 8.507059e+37
    %v595 = vand.u32 %v582, 2147483648
    %v596 = vor.u32 1.1754944e-38, %v595
    %v597 = vsel %vm594, %v596, %v592
    %v598 = vmul.f32 1.0, %v597
    %v599 = vrcp.pop %v583
    %v600 = vmul.f32 %v583, %v599
    %v601 = vsub.f32 1.0, %v600
    %v602 = vmul.f32 %v599, %v601
    %v603 = vadd.f32 %v599, %v602
    %vm604 = vweird.f32 %v583
    %vm605 = vweird.f32 %v599
    %vm606 = vmor %vm604, %vm605
    %v607 = vsel %vm606, %v599, %v603
    %v608 = vand.u32 2147483647, %v583
    %vm609 = vcmp.eq.f32.partialorder %v608, 8.507059e+37
    %v610 = vand.u32 %v583, 2147483648
    %v611 = vor.u32 1.1754944e-38, %v610
    %v612 = vsel %vm609, %v611, %v607
    %v613 = vmul.f32 1.0, %v612
    %v614 = vtanh.pop %v574
    %v615 = vtanh.pop %v575
    %v618 = vrot.slane %v526, 7
    %v619 = vrot.slane %v527, 7
    %v622 = vmul.f32 %v598, %v618
    %v623 = vmul.f32 %v613, %v619
    %626 = vrot.lane.b32.xlu0 %v614, 64
    %v627 = vpop.permute.xlu0 %626
    %628 = vrot.lane.b32.xlu0 %v615, 64
    %v629 = vpop.permute.xlu0 %628
    %v632 = vmul.f32 %v598, %v627
    %v633 = vmul.f32 %v613, %v629
    %636 = vrot.lane.b32.xlu0 %v632, 32
    %v637 = vpop.permute.xlu0 %636
    %638 = vrot.lane.b32.xlu0 %v633, 32
    %v639 = vpop.permute.xlu0 %638
    %v642 = vadd.f32 %v622, %v637
    %v643 = vadd.f32 %v623, %v639
    %v644 = vtanh.pop %v642
    %v645 = vtanh.pop %v643
    %648 = vrot.lane.b32.xlu0 %v644, 64
    %v649 = vpop.permute.xlu0 %648
    %650 = vrot.lane.b32.xlu0 %v645, 64
    %v651 = vpop.permute.xlu0 %650
    %v654 = vmul.f32 %v598, %v649
    %v655 = vmul.f32 %v613, %v651
    %v658 = vrot.slane %v654, 4
    %v659 = vrot.slane %v655, 3
    %v660 = vsel %vm197, %v659, %v658
    %661 = vrot.lane.b32.xlu0 %v660, 32
    %v662 = vpop.permute.xlu0 %661
    %v663 = vsel %vm57, %v662, 0
    %665 = vmatpush.msra.mxu0 0.0
    %666 = vmatpush.msra.mxu0 0.0
    %667 = vmatpush.msra.mxu0 0.0
    %668 = vmatpush.msra.mxu0 0.0
    %669 = vmatpush.msra.mxu0 0.0
    %670 = vmatpush.msra.mxu0 0.0
    %671 = vmatpush.msra.mxu0 0.0
    %672 = vmatpush.msra.mxu0 0.0
    %673 = vmatpush.msra.mxu0 0.0
    %674 = vmatpush.msra.mxu0 0.0
    %675 = vmatpush.msra.mxu0 0.0
    %676 = vmatpush.msra.mxu0 0.0
    %677 = vmatpush.msra.mxu0 %v90
    %678 = vmatpush.msra.mxu0 %v89
    %679 = vmatpush.msra.mxu0 %v88
    %680 = vmatpush.msra.mxu0 %v87
    %681 = vmatmul.f32.gmra.mxu0 %v663
    %v682 = vpop.f32.mrf.mxu0
    %v683 = vadd.f32 0.0, %v682
    %684 = vdwg.mxu0
    %v686 = vrot.slane %v683, 3
    %v687 = vrot.slane %v683, 4
    %v690 = vadd.f32 %v82, %v686
    %v691 = vadd.f32 %v85, %v687
    %v692 = vxor.u32 %v690, 2147483648
    %v693 = vxor.u32 %v691, 2147483648
    %v694 = vmul.f32 %v692, 1.442695
    %v695 = vpow.pop %v694
    %v696 = vmul.f32 %v693, 1.442695
    %v697 = vpow.pop %v696
    %v698 = vadd.f32 %v695, 1.0
    %v699 = vadd.f32 %v697, 1.0
    %v700 = vrcp.pop %v698
    %v701 = vmul.f32 %v698, %v700
    %v702 = vsub.f32 1.0, %v701
    %v703 = vmul.f32 %v700, %v702
    %v704 = vadd.f32 %v700, %v703
    %vm705 = vweird.f32 %v698
    %vm706 = vweird.f32 %v700
    %vm707 = vmor %vm705, %vm706
    %v708 = vsel %vm707, %v700, %v704
    %v709 = vand.u32 2147483647, %v698
    %vm710 = vcmp.eq.f32.partialorder %v709, 8.507059e+37
    %v711 = vand.u32 %v698, 2147483648
    %v712 = vor.u32 1.1754944e-38, %v711
    %v713 = vsel %vm710, %v712, %v708
    %v714 = vmul.f32 1.0, %v713
    %v715 = vrcp.pop %v699
    %v716 = vmul.f32 %v699, %v715
    %v717 = vsub.f32 1.0, %v716
    %v718 = vmul.f32 %v715, %v717
    %v719 = vadd.f32 %v715, %v718
    %vm720 = vweird.f32 %v699
    %vm721 = vweird.f32 %v715
    %vm722 = vmor %vm720, %vm721
    %v723 = vsel %vm722, %v715, %v719
    %v724 = vand.u32 2147483647, %v699
    %vm725 = vcmp.eq.f32.partialorder %v724, 8.507059e+37
    %v726 = vand.u32 %v699, 2147483648
    %v727 = vor.u32 1.1754944e-38, %v726
    %v728 = vsel %vm725, %v727, %v723
    %v729 = vmul.f32 1.0, %v728
    %v730 = vtanh.pop %v690
    %v731 = vtanh.pop %v691
    %v734 = vrot.slane %v642, 7
    %v735 = vrot.slane %v643, 7
    %v738 = vmul.f32 %v714, %v734
    %v739 = vmul.f32 %v729, %v735
    %742 = vrot.lane.b32.xlu0 %v730, 64
    %v743 = vpop.permute.xlu0 %742
    %744 = vrot.lane.b32.xlu0 %v731, 64
    %v745 = vpop.permute.xlu0 %744
    %v748 = vmul.f32 %v714, %v743
    %v749 = vmul.f32 %v729, %v745
    %752 = vrot.lane.b32.xlu0 %v748, 32
    %v753 = vpop.permute.xlu0 %752
    %754 = vrot.lane.b32.xlu0 %v749, 32
    %v755 = vpop.permute.xlu0 %754
    %v758 = vadd.f32 %v738, %v753
    %v759 = vadd.f32 %v739, %v755
    %v760 = vtanh.pop %v758
    %v761 = vtanh.pop %v759
    %764 = vrot.lane.b32.xlu0 %v760, 64
    %v765 = vpop.permute.xlu0 %764
    %766 = vrot.lane.b32.xlu0 %v761, 64
    %v767 = vpop.permute.xlu0 %766
    %v770 = vmul.f32 %v714, %v765
    %v771 = vmul.f32 %v729, %v767
    %v774 = vrot.slane %v770, 5
    %v775 = vrot.slane %v771, 4
    %v776 = vsel %vm197, %v775, %v774
    %777 = vrot.lane.b32.xlu0 %v776, 32
    %v778 = vpop.permute.xlu0 %777
    %v779 = vsel %vm57, %v778, 0
    %781 = vmatpush.msra.mxu0 0.0
    %782 = vmatpush.msra.mxu0 0.0
    %783 = vmatpush.msra.mxu0 0.0
    %784 = vmatpush.msra.mxu0 0.0
    %785 = vmatpush.msra.mxu0 0.0
    %786 = vmatpush.msra.mxu0 0.0
    %787 = vmatpush.msra.mxu0 0.0
    %788 = vmatpush.msra.mxu0 0.0
    %789 = vmatpush.msra.mxu0 0.0
    %790 = vmatpush.msra.mxu0 0.0
    %791 = vmatpush.msra.mxu0 0.0
    %792 = vmatpush.msra.mxu0 0.0
    %793 = vmatpush.msra.mxu0 %v90
    %794 = vmatpush.msra.mxu0 %v89
    %795 = vmatpush.msra.mxu0 %v88
    %796 = vmatpush.msra.mxu0 %v87
    %797 = vmatmul.f32.gmra.mxu0 %v779
    %v798 = vpop.f32.mrf.mxu0
    %v799 = vadd.f32 0.0, %v798
    %800 = vdwg.mxu0
    %v802 = vrot.slane %v799, 2
    %v803 = vrot.slane %v799, 3
    %v806 = vadd.f32 %v82, %v802
    %v807 = vadd.f32 %v85, %v803
    %v808 = vxor.u32 %v806, 2147483648
    %v809 = vxor.u32 %v807, 2147483648
    %v810 = vmul.f32 %v808, 1.442695
    %v811 = vpow.pop %v810
    %v812 = vmul.f32 %v809, 1.442695
    %v813 = vpow.pop %v812
    %v814 = vadd.f32 %v811, 1.0
    %v815 = vadd.f32 %v813, 1.0
    %v816 = vrcp.pop %v814
    %v817 = vmul.f32 %v814, %v816
    %v818 = vsub.f32 1.0, %v817
    %v819 = vmul.f32 %v816, %v818
    %v820 = vadd.f32 %v816, %v819
    %vm821 = vweird.f32 %v814
    %vm822 = vweird.f32 %v816
    %vm823 = vmor %vm821, %vm822
    %v824 = vsel %vm823, %v816, %v820
    %v825 = vand.u32 2147483647, %v814
    %vm826 = vcmp.eq.f32.partialorder %v825, 8.507059e+37
    %v827 = vand.u32 %v814, 2147483648
    %v828 = vor.u32 1.1754944e-38, %v827
    %v829 = vsel %vm826, %v828, %v824
    %v830 = vmul.f32 1.0, %v829
    %v831 = vrcp.pop %v815
    %v832 = vmul.f32 %v815, %v831
    %v833 = vsub.f32 1.0, %v832
    %v834 = vmul.f32 %v831, %v833
    %v835 = vadd.f32 %v831, %v834
    %vm836 = vweird.f32 %v815
    %vm837 = vweird.f32 %v831
    %vm838 = vmor %vm836, %vm837
    %v839 = vsel %vm838, %v831, %v835
    %v840 = vand.u32 2147483647, %v815
    %vm841 = vcmp.eq.f32.partialorder %v840, 8.507059e+37
    %v842 = vand.u32 %v815, 2147483648
    %v843 = vor.u32 1.1754944e-38, %v842
    %v844 = vsel %vm841, %v843, %v839
    %v845 = vmul.f32 1.0, %v844
    %v846 = vtanh.pop %v806
    %v847 = vtanh.pop %v807
    %v850 = vrot.slane %v758, 7
    %v851 = vrot.slane %v759, 7
    %v854 = vmul.f32 %v830, %v850
    %v855 = vmul.f32 %v845, %v851
    %858 = vrot.lane.b32.xlu0 %v846, 64
    %v859 = vpop.permute.xlu0 %858
    %860 = vrot.lane.b32.xlu0 %v847, 64
    %v861 = vpop.permute.xlu0 %860
    %v864 = vmul.f32 %v830, %v859
    %v865 = vmul.f32 %v845, %v861
    %868 = vrot.lane.b32.xlu0 %v864, 32
    %v869 = vpop.permute.xlu0 %868
    %870 = vrot.lane.b32.xlu0 %v865, 32
    %v871 = vpop.permute.xlu0 %870
    %v874 = vadd.f32 %v854, %v869
    %v875 = vadd.f32 %v855, %v871
    %v876 = vtanh.pop %v874
    %v877 = vtanh.pop %v875
    %880 = vrot.lane.b32.xlu0 %v876, 64
    %v881 = vpop.permute.xlu0 %880
    %882 = vrot.lane.b32.xlu0 %v877, 64
    %v883 = vpop.permute.xlu0 %882
    %v886 = vmul.f32 %v830, %v881
    %v887 = vmul.f32 %v845, %v883
    %v890 = vrot.slane %v886, 6
    %v891 = vrot.slane %v887, 5
    %v892 = vsel %vm197, %v891, %v890
    %893 = vrot.lane.b32.xlu0 %v892, 32
    %v894 = vpop.permute.xlu0 %893
    %v895 = vsel %vm57, %v894, 0
    %897 = vmatpush.msra.mxu0 0.0
    %898 = vmatpush.msra.mxu0 0.0
    %899 = vmatpush.msra.mxu0 0.0
    %900 = vmatpush.msra.mxu0 0.0
    %901 = vmatpush.msra.mxu0 0.0
    %902 = vmatpush.msra.mxu0 0.0
    %903 = vmatpush.msra.mxu0 0.0
    %904 = vmatpush.msra.mxu0 0.0
    %905 = vmatpush.msra.mxu0 0.0
    %906 = vmatpush.msra.mxu0 0.0
    %907 = vmatpush.msra.mxu0 0.0
    %908 = vmatpush.msra.mxu0 0.0
    %909 = vmatpush.msra.mxu0 %v90
    %910 = vmatpush.msra.mxu0 %v89
    %911 = vmatpush.msra.mxu0 %v88
    %912 = vmatpush.msra.mxu0 %v87
    %913 = vmatmul.f32.gmra.mxu0 %v895
    %v914 = vpop.f32.mrf.mxu0
    %v915 = vadd.f32 0.0, %v914
    %916 = vdwg.mxu0
    %v918 = vrot.slane %v915, 1
    %v919 = vrot.slane %v915, 2
    %v922 = vadd.f32 %v82, %v918
    %v923 = vadd.f32 %v85, %v919
    %v924 = vxor.u32 %v922, 2147483648
    %v925 = vxor.u32 %v923, 2147483648
    %v926 = vmul.f32 %v924, 1.442695
    %v927 = vpow.pop %v926
    %v928 = vmul.f32 %v925, 1.442695
    %v929 = vpow.pop %v928
    %v930 = vadd.f32 %v927, 1.0
    %v931 = vadd.f32 %v929, 1.0
    %v932 = vrcp.pop %v930
    %v933 = vmul.f32 %v930, %v932
    %v934 = vsub.f32 1.0, %v933
    %v935 = vmul.f32 %v932, %v934
    %v936 = vadd.f32 %v932, %v935
    %vm937 = vweird.f32 %v930
    %vm938 = vweird.f32 %v932
    %vm939 = vmor %vm937, %vm938
    %v940 = vsel %vm939, %v932, %v936
    %v941 = vand.u32 2147483647, %v930
    %vm942 = vcmp.eq.f32.partialorder %v941, 8.507059e+37
    %v943 = vand.u32 %v930, 2147483648
    %v944 = vor.u32 1.1754944e-38, %v943
    %v945 = vsel %vm942, %v944, %v940
    %v946 = vmul.f32 1.0, %v945
    %v947 = vrcp.pop %v931
    %v948 = vmul.f32 %v931, %v947
    %v949 = vsub.f32 1.0, %v948
    %v950 = vmul.f32 %v947, %v949
    %v951 = vadd.f32 %v947, %v950
    %vm952 = vweird.f32 %v931
    %vm953 = vweird.f32 %v947
    %vm954 = vmor %vm952, %vm953
    %v955 = vsel %vm954, %v947, %v951
    %v956 = vand.u32 2147483647, %v931
    %vm957 = vcmp.eq.f32.partialorder %v956, 8.507059e+37
    %v958 = vand.u32 %v931, 2147483648
    %v959 = vor.u32 1.1754944e-38, %v958
    %v960 = vsel %vm957, %v959, %v955
    %v961 = vmul.f32 1.0, %v960
    %v962 = vtanh.pop %v922
    %v963 = vtanh.pop %v923
    %v966 = vrot.slane %v874, 7
    %v967 = vrot.slane %v875, 7
    %v970 = vmul.f32 %v946, %v966
    %v971 = vmul.f32 %v961, %v967
    %974 = vrot.lane.b32.xlu0 %v962, 64
    %v975 = vpop.permute.xlu0 %974
    %976 = vrot.lane.b32.xlu0 %v963, 64
    %v977 = vpop.permute.xlu0 %976
    %v980 = vmul.f32 %v946, %v975
    %v981 = vmul.f32 %v961, %v977
    %984 = vrot.lane.b32.xlu0 %v980, 32
    %v985 = vpop.permute.xlu0 %984
    %986 = vrot.lane.b32.xlu0 %v981, 32
    %v987 = vpop.permute.xlu0 %986
    %v990 = vadd.f32 %v970, %v985
    %v991 = vadd.f32 %v971, %v987
    %v992 = vtanh.pop %v990
    %v993 = vtanh.pop %v991
    %996 = vrot.lane.b32.xlu0 %v992, 64
    %v997 = vpop.permute.xlu0 %996
    %998 = vrot.lane.b32.xlu0 %v993, 64
    %v999 = vpop.permute.xlu0 %998
    %v1002 = vmul.f32 %v946, %v997
    %v1003 = vmul.f32 %v961, %v999
    %v1004 = vld [vmem:[%s4] sm:$0xff]
    %v1005 = vld [vmem:[%s4 + $0x8] sm:$0xff]
    %v1006 = vld [vmem:[%s4 + $0x10] sm:$0xff]
    %v1007 = vld [vmem:[%s4 + $0x18] sm:$0xff]
    %v1008 = vld [vmem:[%s5] sm:$0x1]
    %v1010 = vperm.slane %v1008, 0
    %v1014 = vrot.slane %v1002, 7
    %v1015 = vrot.slane %v1003, 6
    %v1016 = vsel %vm197, %v1015, %v1014
    %1017 = vrot.lane.b32.xlu0 %v1016, 32
    %v1018 = vpop.permute.xlu0 %1017
    %v1019 = vsel %vm57, %v1018, 0
    %1021 = vmatpush.msra.mxu0 0.0
    %1022 = vmatpush.msra.mxu0 0.0
    %1023 = vmatpush.msra.mxu0 0.0
    %1024 = vmatpush.msra.mxu0 0.0
    %1025 = vmatpush.msra.mxu0 0.0
    %1026 = vmatpush.msra.mxu0 0.0
    %1027 = vmatpush.msra.mxu0 0.0
    %1028 = vmatpush.msra.mxu0 0.0
    %1029 = vmatpush.msra.mxu0 0.0
    %1030 = vmatpush.msra.mxu0 0.0
    %1031 = vmatpush.msra.mxu0 0.0
    %1032 = vmatpush.msra.mxu0 0.0
    %1033 = vmatpush.msra.mxu0 %v1007
    %1034 = vmatpush.msra.mxu0 %v1006
    %1035 = vmatpush.msra.mxu0 %v1005
    %1036 = vmatpush.msra.mxu0 %v1004
    %1037 = vmatmul.f32.gmra.mxu0 %v1019
    %v1038 = vpop.f32.mrf.mxu0
    %v1039 = vadd.f32 %v1010, %v1038
    %1040 = vdwg.mxu0
    %v1041 = vmax.f32 %v1039, 0.0
    %v1042 = vld [vmem:[%s6] sm:$0xff]
    %v1043 = vld [vmem:[%s6 + $0x8] sm:$0xff]
    %v1044 = vld [vmem:[#allocation2] sm:$0x1]
    %v1046 = vperm.slane %v1044, 0
    %vm1048 = vcmask 130048
    %v1050 = vsel %vm1048, %v1041, 0
    %1052 = vmatpush.msra.mxu0 0.0
    %1053 = vmatpush.msra.mxu0 0.0
    %1054 = vmatpush.msra.mxu0 0.0
    %1055 = vmatpush.msra.mxu0 0.0
    %1056 = vmatpush.msra.mxu0 0.0
    %1057 = vmatpush.msra.mxu0 0.0
    %1058 = vmatpush.msra.mxu0 0.0
    %1059 = vmatpush.msra.mxu0 0.0
    %1060 = vmatpush.msra.mxu0 0.0
    %1061 = vmatpush.msra.mxu0 0.0
    %1062 = vmatpush.msra.mxu0 0.0
    %1063 = vmatpush.msra.mxu0 0.0
    %1064 = vmatpush.msra.mxu0 0.0
    %1065 = vmatpush.msra.mxu0 0.0
    %1066 = vmatpush.msra.mxu0 %v1043
    %1067 = vmatpush.msra.mxu0 %v1042
    %1068 = vmatmul.f32.gmra.mxu0 %v1050
    %v1069 = vpop.f32.mrf.mxu0
    %v1070 = vadd.f32 %v1046, %v1069
    %1071 = vdwg.mxu0
    %v1072 = vxor.u32 %v1070, 2147483648
    %v1073 = vmul.f32 %v1072, 1.442695
    %v1074 = vpow.pop %v1073
    %v1075 = vadd.f32 %v1074, 1.0
    %v1076 = vrcp.pop %v1075
    %v1077 = vmul.f32 %v1075, %v1076
    %v1078 = vsub.f32 1.0, %v1077
    %v1079 = vmul.f32 %v1076, %v1078
    %v1080 = vadd.f32 %v1076, %v1079
    %vm1081 = vweird.f32 %v1075
    %vm1082 = vweird.f32 %v1076
    %vm1083 = vmor %vm1081, %vm1082
    %v1084 = vsel %vm1083, %v1076, %v1080
    %v1085 = vand.u32 2147483647, %v1075
    %vm1086 = vcmp.eq.f32.partialorder %v1085, 8.507059e+37
    %v1087 = vand.u32 %v1075, 2147483648
    %v1088 = vor.u32 1.1754944e-38, %v1087
    %v1089 = vsel %vm1086, %v1088, %v1084
    %v1090 = vmul.f32 1.0, %v1089
    %vm1091 = vcmask 1024
    %1092 = vst.msk [vmem:[%s8] sm:$0x3] %vm1091, %v1090
    // Predicated region
    $region38: #{tpu_custom_call.1} parent=1 // pred_check
      _
    $region39: #{tpu_custom_call.1} parent=1 // pred_check_branch
      %1094 = sbr.rel (0) target = $region41
    $region40: #{tpu_custom_call.1} parent=1 // pred_region
      _
    $region41: #{tpu_custom_call.1} parent=1 // pred_fallthru
      _
    // Predicated region
    $region42: #{tpu_custom_call.1} parent=1 // pred_check
      _
    $region43: #{tpu_custom_call.1} parent=1 // pred_check_branch
      %1096 = sbr.rel (0) target = $region45
    $region44: #{tpu_custom_call.1} parent=1 // pred_region
      _
    $region45: #{tpu_custom_call.1} parent=1 // pred_fallthru
      _
    %1097 = vsyncpa [#allocation4], 1

</llo_original>
